<compile_context>
chip_gen: v5e
topology: v5e:2x2
jax: 0.10.0
libtpu: 0.0.40
codegen_flags: <defaults>
</compile_context>

<pallas_src>
import functools
import math

import jax
import jax.numpy as jnp
from jax.experimental import pallas as pl
from jax.experimental.pallas import tpu as pltpu


_LANE = 128     # vreg lane width  (last dim)
_SUBLANE = 8    # vreg sublane height for f32 (second-to-last dim)


def _round_up(n, m):
    return ((n + m - 1) // m) * m


def _mlp_kernel(*refs, pdims):
    # refs = (x_ref, w0_ref, ..., w{L-1}_ref, bias_stack_ref, o_ref)
    x_ref = refs[0]
    b_ref = refs[-2]          # [L, max_Dp]  f32 (all biases stacked)
    o_ref = refs[-1]          # [tb, D_last_p] f32
    w_refs = refs[1:-2]       # each [Din_p, Dout_p] bf16, resident in VMEM
    n_layers = len(w_refs)

    act = x_ref[...]                                        # [tb, D0p] bf16
    for i in range(n_layers):
        dout_p = pdims[i + 1]
        # bf16 x bf16 -> f32 accumulate on the MXU.
        acc = jnp.dot(act, w_refs[i][...], preferred_element_type=jnp.float32)
        acc = acc + b_ref[i:i + 1, :dout_p]                 # bias add in f32
        if i < n_layers - 1:
            acc = jnp.maximum(acc, 0.0)                     # ReLU in f32 (Dropout = identity, eval)
            act = acc.astype(jnp.bfloat16)                  # back to bf16 for next matmul
        else:
            o_ref[...] = acc.astype(o_ref.dtype)


def prepare_mlp_params(params):
    """One-time (init-time) padding + casting of all weights / biases.

    params: list of (w [Din, Dout] f32, b [Dout] f32)
    Returns (padded bf16 weights list, stacked f32 bias [L, max_Dp], pdims, dims).
    """
    dims = tuple([params[0][0].shape[0]] + [w.shape[1] for w, _ in params])
    pdims = tuple(_round_up(d, _LANE) for d in dims)
    max_dp = max(pdims[1:])

    padded_ws, bias_rows = [], []
    for li, (w, b) in enumerate(params):
        din_p, dout_p = pdims[li], pdims[li + 1]
        w_p = jnp.pad(w, ((0, din_p - w.shape[0]), (0, dout_p - w.shape[1])))
        padded_ws.append(w_p.astype(jnp.bfloat16))
        bias_rows.append(jnp.pad(b, (0, max_dp - b.shape[0])).astype(jnp.float32))
    bias_stack = jnp.stack(bias_rows)                       # [L, max_Dp] f32
    return padded_ws, bias_stack, pdims, dims


@functools.partial(jax.jit, static_argnames=("pdims", "out_dim", "tb"))
def mlp_forward(x, padded_ws, bias_stack, pdims, out_dim, *, tb=128):
    """Fused MLP forward. x: [B, Din] f32. padded_ws/bias_stack from prepare_mlp_params."""
    B, Din = x.shape
    n_layers = len(padded_ws)

    # Batch tiling: tb rows per grid step (multiple of 8 sublanes).
    Bp = _round_up(B, _SUBLANE)
    tb = min(tb, Bp)
    Bp = _round_up(Bp, tb)
    grid = (Bp // tb,)

    # Only the activations need per-call padding; weights were padded at init.
    x_p = jnp.pad(x, ((0, Bp - B), (0, pdims[0] - Din))).astype(jnp.bfloat16)

    in_specs = [pl.BlockSpec((tb, pdims[0]), lambda i: (i, 0))]          # moves with grid
    for li in range(n_layers):
        in_specs.append(                                                  # resident weights
            pl.BlockSpec((pdims[li], pdims[li + 1]), lambda i: (0, 0)))
    in_specs.append(pl.BlockSpec(bias_stack.shape, lambda i: (0, 0)))     # resident biases
    out_spec = pl.BlockSpec((tb, pdims[-1]), lambda i: (i, 0))

    # Advisory cost estimate on the padded problem.
    flops = 2 * Bp * sum(pdims[i] * pdims[i + 1] for i in range(n_layers))
    bytes_accessed = (
        x_p.size * x_p.dtype.itemsize
        + sum(w.size * w.dtype.itemsize for w in padded_ws)
        + bias_stack.size * bias_stack.dtype.itemsize
        + Bp * pdims[-1] * 4)
    cost = pl.CostEstimate(flops=flops, transcendentals=0,
                           bytes_accessed=bytes_accessed)

    # VMEM budget: double-buffered x/out tiles + resident weights/biases (pipeliner
    # allocates 2 buffers each) + f32 intermediates. Clamp to 64 MiB (v7x-safe).
    resident_bytes = (
        2 * tb * pdims[0] * 2                    # x tiles (bf16, double-buffered)
        + 2 * tb * pdims[-1] * 4                 # out tiles (f32, double-buffered)
        + 2 * sum(w.size * w.dtype.itemsize for w in padded_ws)
        + 2 * bias_stack.size * bias_stack.dtype.itemsize
        + 2 * tb * max(pdims) * 4)               # live f32 activation headroom
    vmem_limit = int(min(64 * 1024 * 1024, max(32 * 1024 * 1024, 2 * resident_bytes)))

    out_p = pl.pallas_call(
        functools.partial(_mlp_kernel, pdims=pdims),
        out_shape=jax.ShapeDtypeStruct((Bp, pdims[-1]), jnp.float32),
        grid=grid,
        in_specs=in_specs,
        out_specs=out_spec,
        compiler_params=pltpu.CompilerParams(
            dimension_semantics=("parallel",),   # batch tiles are independent (megacore on v7x)
            vmem_limit_bytes=vmem_limit,
        ),
        cost_estimate=cost,
    )(x_p, *padded_ws, bias_stack)

    return out_p[:B, :out_dim]                   # strip padding outside the kernel


def xavier_uniform(key, fan_in, fan_out, dtype=jnp.float32):
    bound = math.sqrt(6.0 / (fan_in + fan_out))
    # stored as [fan_in, fan_out] == PyTorch weight.T
    return jax.random.uniform(key, (fan_in, fan_out), dtype, -bound, bound)


def init_mlp_params(key, input_dim, num_hidden_layers, num_hidden_units, output_dim):
    params = []
    dims = [input_dim] + [num_hidden_units] * (num_hidden_layers + 1) + [output_dim]
    for i in range(len(dims) - 1):
        key, sub = jax.random.split(key)
        w = xavier_uniform(sub, dims[i], dims[i + 1])
        b = jnp.zeros((dims[i + 1],), jnp.float32)
        params.append((w, b))
    return params


if __name__ == "__main__":
    # Config consistent with MLP.__init__
    input_dim = 16
    num_hidden_layers = 2
    num_hidden_units = 32
    output_dim = 8
    batch = 4

    key = jax.random.PRNGKey(0)
    key, xkey = jax.random.split(key)
    x = jax.random.normal(xkey, (batch, input_dim), jnp.float32)

    params = init_mlp_params(key, input_dim, num_hidden_layers,
                             num_hidden_units, output_dim)

    # One-time padded/bf16 param preparation (hoisted out of the forward path).
    padded_ws, bias_stack, pdims, dims = prepare_mlp_params(params)

    out = mlp_forward(x, padded_ws, bias_stack, pdims, dims[-1])
    out = jax.block_until_ready(out)
    assert out.shape == (batch, output_dim)

    # Reference 1: emulate kernel numerics (bf16 operands, f32 accumulate) -> tight tol.
    ref_bf = x
    for li, (w, b) in enumerate(params):
        a = ref_bf.astype(jnp.bfloat16).astype(jnp.float32)
        wf = w.astype(jnp.bfloat16).astype(jnp.float32)
        acc = a @ wf + b
        ref_bf = jnp.maximum(acc, 0.0) if li < len(params) - 1 else acc
    assert jnp.allclose(out, ref_bf, atol=1e-3, rtol=1e-3)

    # Reference 2: pure f32 math -> loose tol (bf16 operand rounding).
    ref = x
    for w, b in params[:-1]:
        ref = jnp.maximum(ref @ w + b, 0.0)
    ref = ref @ params[-1][0] + params[-1][1]
    assert jnp.allclose(out, ref, atol=5e-2, rtol=5e-2)

    print("KERNEL_OK")
</pallas_src>

<mosaic_0001>
module attributes {stable_mosaic.version = 11 : i64} {
  func.func @_mlp_kernel(%arg0: i32, %arg1: memref<8x128xbf16, #tpu.memory_space<vmem>>, %arg2: memref<128x128xbf16, #tpu.memory_space<vmem>>, %arg3: memref<128x128xbf16, #tpu.memory_space<vmem>>, %arg4: memref<128x128xbf16, #tpu.memory_space<vmem>>, %arg5: memref<128x128xbf16, #tpu.memory_space<vmem>>, %arg6: memref<4x128xf32, #tpu.memory_space<vmem>>, %arg7: memref<8x128xf32, #tpu.memory_space<vmem>>) attributes {dimension_semantics = [#tpu.dimension_semantics<parallel>], iteration_bounds = array<i64: 1>, scalar_prefetch = 0 : i64, scratch_operands = 0 : i64, tpu.core_type = #tpu.core_type<tc>, window_params = [{transform_indices = @transform_0, window_bounds = array<i64: 8, 128>}, {pipeline_mode = #tpu.pipeline_mode<synchronous>, transform_indices = @transform_1, window_bounds = array<i64: 128, 128>}, {pipeline_mode = #tpu.pipeline_mode<synchronous>, transform_indices = @transform_2, window_bounds = array<i64: 128, 128>}, {pipeline_mode = #tpu.pipeline_mode<synchronous>, transform_indices = @transform_3, window_bounds = array<i64: 128, 128>}, {pipeline_mode = #tpu.pipeline_mode<synchronous>, transform_indices = @transform_4, window_bounds = array<i64: 128, 128>}, {pipeline_mode = #tpu.pipeline_mode<synchronous>, transform_indices = @transform_5, window_bounds = array<i64: 4, 128>}, {transform_indices = @transform_6, window_bounds = array<i64: 8, 128>}]} {
    %c0 = arith.constant 0 : index
    %c0_0 = arith.constant 0 : index
    %0 = vector.load %arg1[%c0, %c0_0] : memref<8x128xbf16, #tpu.memory_space<vmem>>, vector<8x128xbf16>
    %c0_1 = arith.constant 0 : index
    %c0_2 = arith.constant 0 : index
    %1 = vector.load %arg2[%c0_1, %c0_2] : memref<128x128xbf16, #tpu.memory_space<vmem>>, vector<128x128xbf16>
    %cst = arith.constant dense<0.000000e+00> : vector<8x128xf32>
    %2 = tpu.matmul %0, %1, %cst {dimension_numbers = #tpu.dot_dimension_numbers<[1], [0], [0], [1], [0, 0, 1, 1], [], []>} : vector<8x128xbf16>, vector<128x128xbf16>, vector<8x128xf32> -> vector<8x128xf32>
    %c0_3 = arith.constant 0 : index
    %c0_4 = arith.constant 0 : index
    %3 = vector.load %arg6[%c0_3, %c0_4] : memref<4x128xf32, #tpu.memory_space<vmem>>, vector<1x128xf32>
    %4 = vector.broadcast %3 : vector<1x128xf32> to vector<8x128xf32>
    %5 = arith.addf %2, %4 : vector<8x128xf32>
    %cst_5 = arith.constant 0.000000e+00 : f32
    %6 = vector.broadcast %cst_5 : f32 to vector<8x128xf32>
    %7 = arith.maximumf %5, %6 : vector<8x128xf32>
    %8 = arith.truncf %7 : vector<8x128xf32> to vector<8x128xbf16>
    %c0_6 = arith.constant 0 : index
    %c0_7 = arith.constant 0 : index
    %9 = vector.load %arg3[%c0_6, %c0_7] : memref<128x128xbf16, #tpu.memory_space<vmem>>, vector<128x128xbf16>
    %cst_8 = arith.constant dense<0.000000e+00> : vector<8x128xf32>
    %10 = tpu.matmul %8, %9, %cst_8 {dimension_numbers = #tpu.dot_dimension_numbers<[1], [0], [0], [1], [0, 0, 1, 1], [], []>} : vector<8x128xbf16>, vector<128x128xbf16>, vector<8x128xf32> -> vector<8x128xf32>
    %c1 = arith.constant 1 : index
    %c0_9 = arith.constant 0 : index
    %11 = vector.load %arg6[%c1, %c0_9] : memref<4x128xf32, #tpu.memory_space<vmem>>, vector<1x128xf32>
    %12 = vector.broadcast %11 : vector<1x128xf32> to vector<8x128xf32>
    %13 = arith.addf %10, %12 : vector<8x128xf32>
    %cst_10 = arith.constant 0.000000e+00 : f32
    %14 = vector.broadcast %cst_10 : f32 to vector<8x128xf32>
    %15 = arith.maximumf %13, %14 : vector<8x128xf32>
    %16 = arith.truncf %15 : vector<8x128xf32> to vector<8x128xbf16>
    %c0_11 = arith.constant 0 : index
    %c0_12 = arith.constant 0 : index
    %17 = vector.load %arg4[%c0_11, %c0_12] : memref<128x128xbf16, #tpu.memory_space<vmem>>, vector<128x128xbf16>
    %cst_13 = arith.constant dense<0.000000e+00> : vector<8x128xf32>
    %18 = tpu.matmul %16, %17, %cst_13 {dimension_numbers = #tpu.dot_dimension_numbers<[1], [0], [0], [1], [0, 0, 1, 1], [], []>} : vector<8x128xbf16>, vector<128x128xbf16>, vector<8x128xf32> -> vector<8x128xf32>
    %c2 = arith.constant 2 : index
    %c0_14 = arith.constant 0 : index
    %19 = vector.load %arg6[%c2, %c0_14] : memref<4x128xf32, #tpu.memory_space<vmem>>, vector<1x128xf32>
    %20 = vector.broadcast %19 : vector<1x128xf32> to vector<8x128xf32>
    %21 = arith.addf %18, %20 : vector<8x128xf32>
    %cst_15 = arith.constant 0.000000e+00 : f32
    %22 = vector.broadcast %cst_15 : f32 to vector<8x128xf32>
    %23 = arith.maximumf %21, %22 : vector<8x128xf32>
    %24 = arith.truncf %23 : vector<8x128xf32> to vector<8x128xbf16>
    %c0_16 = arith.constant 0 : index
    %c0_17 = arith.constant 0 : index
    %25 = vector.load %arg5[%c0_16, %c0_17] : memref<128x128xbf16, #tpu.memory_space<vmem>>, vector<128x128xbf16>
    %cst_18 = arith.constant dense<0.000000e+00> : vector<8x128xf32>
    %26 = tpu.matmul %24, %25, %cst_18 {dimension_numbers = #tpu.dot_dimension_numbers<[1], [0], [0], [1], [0, 0, 1, 1], [], []>} : vector<8x128xbf16>, vector<128x128xbf16>, vector<8x128xf32> -> vector<8x128xf32>
    %c3 = arith.constant 3 : index
    %c0_19 = arith.constant 0 : index
    %27 = vector.load %arg6[%c3, %c0_19] : memref<4x128xf32, #tpu.memory_space<vmem>>, vector<1x128xf32>
    %28 = vector.broadcast %27 : vector<1x128xf32> to vector<8x128xf32>
    %29 = arith.addf %26, %28 : vector<8x128xf32>
    %c0_20 = arith.constant 0 : index
    %c0_21 = arith.constant 0 : index
    %30 = vector.load %arg7[%c0_20, %c0_21] : memref<8x128xf32, #tpu.memory_space<vmem>>, vector<8x128xf32>
    tpu.vector_store %arg7[%c0_20, %c0_21], %29 {strides = array<i32>} : memref<8x128xf32, #tpu.memory_space<vmem>>, vector<8x128xf32>,
    return
  }
  func.func @transform_0(%arg0: i32) -> (i32, i32) {
    %c0_i32 = arith.constant 0 : i32
    %c0_i32_0 = arith.constant 0 : i32
    return %arg0, %c0_i32 : i32, i32
  }
  func.func @transform_1(%arg0: i32) -> (i32, i32) {
    %c0_i32 = arith.constant 0 : i32
    %c0_i32_0 = arith.constant 0 : i32
    %c0_i32_1 = arith.constant 0 : i32
    return %c0_i32, %c0_i32_0 : i32, i32
  }
  func.func @transform_2(%arg0: i32) -> (i32, i32) {
    %c0_i32 = arith.constant 0 : i32
    %c0_i32_0 = arith.constant 0 : i32
    %c0_i32_1 = arith.constant 0 : i32
    return %c0_i32, %c0_i32_0 : i32, i32
  }
  func.func @transform_3(%arg0: i32) -> (i32, i32) {
    %c0_i32 = arith.constant 0 : i32
    %c0_i32_0 = arith.constant 0 : i32
    %c0_i32_1 = arith.constant 0 : i32
    return %c0_i32, %c0_i32_0 : i32, i32
  }
  func.func @transform_4(%arg0: i32) -> (i32, i32) {
    %c0_i32 = arith.constant 0 : i32
    %c0_i32_0 = arith.constant 0 : i32
    %c0_i32_1 = arith.constant 0 : i32
    return %c0_i32, %c0_i32_0 : i32, i32
  }
  func.func @transform_5(%arg0: i32) -> (i32, i32) {
    %c0_i32 = arith.constant 0 : i32
    %c0_i32_0 = arith.constant 0 : i32
    %c0_i32_1 = arith.constant 0 : i32
    return %c0_i32, %c0_i32_0 : i32, i32
  }
  func.func @transform_6(%arg0: i32) -> (i32, i32) {
    %c0_i32 = arith.constant 0 : i32
    %c0_i32_0 = arith.constant 0 : i32
    return %arg0, %c0_i32 : i32, i32
  }
}

</mosaic_0001>

<llo_original>
// kernel: mlp_forward.1
$region0: #{mlp_forward.1}
  #allocation0 [shape = 'u32[]', space=smem, size = 0x4, offset = 0x4, fixed_abs, tag = 'smem constant byte address 0x4 - core index']
  #allocation1 [shape = 'u32[72,128]{1,0:T(1,128)}', space=vmem, size = 0x9000, scoped, tag = 'internal scratch']
  %s0 = inlined_call_operand.vmem [shape: bf16[8,128], index: 0, kind: input, shape index: {}]
  %s1 = inlined_call_operand.hbm [shape: bf16[128,128], index: 1, kind: input, shape index: {}]
  %s2 = inlined_call_operand.hbm [shape: bf16[128,128], index: 2, kind: input, shape index: {}]
  %s3 = inlined_call_operand.hbm [shape: bf16[128,128], index: 3, kind: input, shape index: {}]
  %s4 = inlined_call_operand.hbm [shape: bf16[128,128], index: 4, kind: input, shape index: {}]
  %s5 = inlined_call_operand.vmem [shape: f32[4,128], index: 5, kind: input, shape index: {}]
  %s6 = inlined_call_operand.vmem [shape: f32[8,128], index: 6, kind: output, shape index: {}]
  %s7 = sld [smem:[#allocation0]]
  $region50: #{mlp_forward.1} parent=0
    _
  %s9 = ssub.s32 1, %s7
  %s10 = scalar_select 0, %s9, %s7
  $region1: #{mlp_forward.1} parent=0
    #allocation2 [shape = 'u8[32768]{0}', space=vmem, size = 0x8000, scoped, tag = 'input window, operand 1, single buffered']
    #allocation3 [shape = 's32[1]{0}', space=sflag, size = 0x4, scoped, tag = 'scoped memory for mlp_forward.1']
    #allocation4 [shape = 'u8[32768]{0}', space=vmem, size = 0x8000, scoped, tag = 'input window, operand 2, single buffered']
    #allocation5 [shape = 's32[1]{0}', space=sflag, size = 0x4, scoped, tag = 'scoped memory for mlp_forward.1']
    #allocation6 [shape = 'u8[32768]{0}', space=vmem, size = 0x8000, scoped, tag = 'input window, operand 3, single buffered']
    #allocation7 [shape = 'u8[32768]{0}', space=vmem, size = 0x8000, scoped, tag = 'input window, operand 4, single buffered']
    #allocation8 [shape = 's32[1]{0}', space=sflag, size = 0x4, scoped, tag = 'scoped memory for mlp_forward.1']
    %11 = vsyncpa [#allocation3], 0
    %12 = vsyncpa [#allocation5], 0
    %13 = vsyncpa [#allocation8], 0
    // Predicated region
    $region2: #{mlp_forward.1} parent=1 // pred_check
      _
    $region3: #{mlp_forward.1} parent=1 // pred_check_branch
      %15 = sbr.rel (0) target = $region5
    $region4: #{mlp_forward.1} parent=1 // pred_region
      _
    $region5: #{mlp_forward.1} parent=1 // pred_fallthru
      _
    // Predicated region
    $region6: #{mlp_forward.1} parent=1 // pred_check
      _
    $region7: #{mlp_forward.1} parent=1 // pred_check_branch
      %17 = sbr.rel (0) target = $region9
    $region8: #{mlp_forward.1} parent=1 // pred_region
      %19 = vsyncadd [#allocation3], 0
      %s20 = sshll.u32 %s1, 4
      %s21 = int_to_ptr.hbm [resolvable:$true] %s20
      %s22 = sshll.u32 [#allocation2], 4
      %s23 = int_to_ptr.vmem [resolvable:$true] %s22
      %28 = dma.hbm_to_vmem [thread:$0]  %s21, 1024, %s23, [#allocation3], 64, 64, 4
    $region9: #{mlp_forward.1} parent=1 // pred_fallthru
      _
    // Predicated region
    $region10: #{mlp_forward.1} parent=1 // pred_check
      _
    $region11: #{mlp_forward.1} parent=1 // pred_check_branch
      %30 = sbr.rel (0) target = $region13
    $region12: #{mlp_forward.1} parent=1 // pred_region
      %32 = vsyncadd [#allocation5], 0
      %s33 = sshll.u32 %s2, 4
      %s34 = int_to_ptr.hbm [resolvable:$true] %s33
      %s35 = sshll.u32 [#allocation4], 4
      %s36 = int_to_ptr.vmem [resolvable:$true] %s35
      %41 = dma.hbm_to_vmem [thread:$0]  %s34, 1024, %s36, [#allocation5], 64, 64, 4
    $region13: #{mlp_forward.1} parent=1 // pred_fallthru
      _
    // Predicated region
    $region14: #{mlp_forward.1} parent=1 // pred_check
      _
    $region15: #{mlp_forward.1} parent=1 // pred_check_branch
      %43 = sbr.rel (0) target = $region17
    $region16: #{mlp_forward.1} parent=1 // pred_region
      %45 = vsyncadd [#allocation5], 0
      %s46 = sshll.u32 %s3, 4
      %s47 = int_to_ptr.hbm [resolvable:$true] %s46
      %s48 = sshll.u32 [#allocation6], 4
      %s49 = int_to_ptr.vmem [resolvable:$true] %s48
      %54 = dma.hbm_to_vmem [thread:$0]  %s47, 1024, %s49, [#allocation5], 64, 64, 4
    $region17: #{mlp_forward.1} parent=1 // pred_fallthru
      _
    // Predicated region
    $region18: #{mlp_forward.1} parent=1 // pred_check
      _
    $region19: #{mlp_forward.1} parent=1 // pred_check_branch
      %56 = sbr.rel (0) target = $region21
    $region20: #{mlp_forward.1} parent=1 // pred_region
      %58 = vsyncadd [#allocation8], 0
      %s59 = sshll.u32 %s4, 4
      %s60 = int_to_ptr.hbm [resolvable:$true] %s59
      %s61 = sshll.u32 [#allocation7], 4
      %s62 = int_to_ptr.vmem [resolvable:$true] %s61
      %67 = dma.hbm_to_vmem [thread:$0]  %s60, 1024, %s62, [#allocation8], 64, 64, 4
    $region21: #{mlp_forward.1} parent=1 // pred_fallthru
      _
    // Predicated region
    $region22: #{mlp_forward.1} parent=1 // pred_check
      _
    $region23: #{mlp_forward.1} parent=1 // pred_check_branch
      %69 = sbr.rel (0) target = $region25
    $region24: #{mlp_forward.1} parent=1 // pred_region
      _
    $region25: #{mlp_forward.1} parent=1 // pred_fallthru
      _
    // Predicated region
    $region26: #{mlp_forward.1} parent=1 // pred_check
      _
    $region27: #{mlp_forward.1} parent=1 // pred_check_branch
      %71 = sbr.rel (0) target = $region29
    $region28: #{mlp_forward.1} parent=1 // pred_region
      %73 = dma.done [#allocation3], 1024
    $region29: #{mlp_forward.1} parent=1 // pred_fallthru
      _
    // Predicated region
    $region30: #{mlp_forward.1} parent=1 // pred_check
      _
    $region31: #{mlp_forward.1} parent=1 // pred_check_branch
      %75 = sbr.rel (0) target = $region33
    $region32: #{mlp_forward.1} parent=1 // pred_region
      %77 = dma.done [#allocation5], 1024
    $region33: #{mlp_forward.1} parent=1 // pred_fallthru
      _
    // Predicated region
    $region34: #{mlp_forward.1} parent=1 // pred_check
      _
    $region35: #{mlp_forward.1} parent=1 // pred_check_branch
      %79 = sbr.rel (0) target = $region37
    $region36: #{mlp_forward.1} parent=1 // pred_region
      %81 = dma.done [#allocation5], 1024
    $region37: #{mlp_forward.1} parent=1 // pred_fallthru
      _
    // Predicated region
    $region38: #{mlp_forward.1} parent=1 // pred_check
      _
    $region39: #{mlp_forward.1} parent=1 // pred_check_branch
      %83 = sbr.rel (0) target = $region41
    $region40: #{mlp_forward.1} parent=1 // pred_region
      %85 = dma.done [#allocation8], 1024
    $region41: #{mlp_forward.1} parent=1 // pred_fallthru
      _
    %v86 = vld [vmem:[%s0] sm:$0xf]
    %v87 = vld [vmem:[#allocation2] sm:$0xf]
    %v88 = vld [vmem:[#allocation2 + $0x4] sm:$0xf]
    %v89 = vld [vmem:[#allocation2 + $0x8] sm:$0xf]
    %v90 = vld [vmem:[#allocation2 + $0xc] sm:$0xf]
    %v91 = vld [vmem:[#allocation2 + $0x10] sm:$0xf]
    %v92 = vld [vmem:[#allocation2 + $0x14] sm:$0xf]
    %v93 = vld [vmem:[#allocation2 + $0x18] sm:$0xf]
    %v94 = vld [vmem:[#allocation2 + $0x1c] sm:$0xf]
    %v95 = vld [vmem:[#allocation2 + $0x20] sm:$0xf]
    %v96 = vld [vmem:[#allocation2 + $0x24] sm:$0xf]
    %v97 = vld [vmem:[#allocation2 + $0x28] sm:$0xf]
    %v98 = vld [vmem:[#allocation2 + $0x2c] sm:$0xf]
    %v99 = vld [vmem:[#allocation2 + $0x30] sm:$0xf]
    %v100 = vld [vmem:[#allocation2 + $0x34] sm:$0xf]
    %v101 = vld [vmem:[#allocation2 + $0x38] sm:$0xf]
    %v102 = vld [vmem:[#allocation2 + $0x3c] sm:$0xf]
    %v103 = vld [vmem:[%s5] sm:$0x1]
    %v104 = vperm.slane %v103, 0
    %v121 = vunpack.c.l.b16 %v87
    %v122 = vunpack.c.l.b16 %v88
    %v123 = vunpack.c.l.b16 %v89
    %v124 = vunpack.c.l.b16 %v90
    %v125 = vunpack.c.l.b16 %v91
    %v126 = vunpack.c.l.b16 %v92
    %v127 = vunpack.c.l.b16 %v93
    %v128 = vunpack.c.l.b16 %v94
    %v129 = vunpack.c.l.b16 %v95
    %v130 = vunpack.c.l.b16 %v96
    %v131 = vunpack.c.l.b16 %v97
    %v132 = vunpack.c.l.b16 %v98
    %v133 = vunpack.c.l.b16 %v99
    %v134 = vunpack.c.l.b16 %v100
    %v135 = vunpack.c.l.b16 %v101
    %v136 = vunpack.c.l.b16 %v102
    %v137 = vpack.c.b16 %v122, %v121
    %v138 = vpack.c.b16 %v124, %v123
    %v139 = vpack.c.b16 %v126, %v125
    %v140 = vpack.c.b16 %v128, %v127
    %v141 = vpack.c.b16 %v130, %v129
    %v142 = vpack.c.b16 %v132, %v131
    %v143 = vpack.c.b16 %v134, %v133
    %v144 = vpack.c.b16 %v136, %v135
    %153 = vmatpush.bf16.msra.mxu0 %v144
    %154 = vmatpush.bf16.msra.mxu0 %v143
    %155 = vmatpush.bf16.msra.mxu0 %v142
    %156 = vmatpush.bf16.msra.mxu0 %v141
    %157 = vmatpush.bf16.msra.mxu0 %v140
    %158 = vmatpush.bf16.msra.mxu0 %v139
    %159 = vmatpush.bf16.msra.mxu0 %v138
    %160 = vmatpush.bf16.msra.mxu0 %v137
    %161 = vmatmul.bf16.gmra.mxu0 %v86
    %v162 = vpop.f32.mrf.mxu0
    %v163 = vadd.f32 %v104, %v162
    %v164 = vpop.f32.mrf.mxu0
    %165 = vdwg.mxu0
    %v166 = vmax.f32 %v163, 0.0
    %v167 = vpack.c.bf16 %v166, %v166
    %v168 = vld [vmem:[#allocation4] sm:$0xf]
    %v169 = vld [vmem:[#allocation4 + $0x4] sm:$0xf]
    %v170 = vld [vmem:[#allocation4 + $0x8] sm:$0xf]
    %v171 = vld [vmem:[#allocation4 + $0xc] sm:$0xf]
    %v172 = vld [vmem:[#allocation4 + $0x10] sm:$0xf]
    %v173 = vld [vmem:[#allocation4 + $0x14] sm:$0xf]
    %v174 = vld [vmem:[#allocation4 + $0x18] sm:$0xf]
    %v175 = vld [vmem:[#allocation4 + $0x1c] sm:$0xf]
    %v176 = vld [vmem:[#allocation4 + $0x20] sm:$0xf]
    %v177 = vld [vmem:[#allocation4 + $0x24] sm:$0xf]
    %v178 = vld [vmem:[#allocation4 + $0x28] sm:$0xf]
    %v179 = vld [vmem:[#allocation4 + $0x2c] sm:$0xf]
    %v180 = vld [vmem:[#allocation4 + $0x30] sm:$0xf]
    %v181 = vld [vmem:[#allocation4 + $0x34] sm:$0xf]
    %v182 = vld [vmem:[#allocation4 + $0x38] sm:$0xf]
    %v183 = vld [vmem:[#allocation4 + $0x3c] sm:$0xf]
    %v184 = vld [vmem:[%s5 + $0x1] sm:$0x1]
    %v185 = vperm.slane %v184, 0
    %v202 = vunpack.c.l.b16 %v168
    %v203 = vunpack.c.l.b16 %v169
    %v204 = vunpack.c.l.b16 %v170
    %v205 = vunpack.c.l.b16 %v171
    %v206 = vunpack.c.l.b16 %v172
    %v207 = vunpack.c.l.b16 %v173
    %v208 = vunpack.c.l.b16 %v174
    %v209 = vunpack.c.l.b16 %v175
    %v210 = vunpack.c.l.b16 %v176
    %v211 = vunpack.c.l.b16 %v177
    %v212 = vunpack.c.l.b16 %v178
    %v213 = vunpack.c.l.b16 %v179
    %v214 = vunpack.c.l.b16 %v180
    %v215 = vunpack.c.l.b16 %v181
    %v216 = vunpack.c.l.b16 %v182
    %v217 = vunpack.c.l.b16 %v183
    %v218 = vpack.c.b16 %v203, %v202
    %v219 = vpack.c.b16 %v205, %v204
    %v220 = vpack.c.b16 %v207, %v206
    %v221 = vpack.c.b16 %v209, %v208
    %v222 = vpack.c.b16 %v211, %v210
    %v223 = vpack.c.b16 %v213, %v212
    %v224 = vpack.c.b16 %v215, %v214
    %v225 = vpack.c.b16 %v217, %v216
    %234 = vmatpush.bf16.msra.mxu0 %v225
    %235 = vmatpush.bf16.msra.mxu0 %v224
    %236 = vmatpush.bf16.msra.mxu0 %v223
    %237 = vmatpush.bf16.msra.mxu0 %v222
    %238 = vmatpush.bf16.msra.mxu0 %v221
    %239 = vmatpush.bf16.msra.mxu0 %v220
    %240 = vmatpush.bf16.msra.mxu0 %v219
    %241 = vmatpush.bf16.msra.mxu0 %v218
    %242 = vmatmul.bf16.gmra.mxu0 %v167
    %v243 = vpop.f32.mrf.mxu0
    %v244 = vadd.f32 %v185, %v243
    %v245 = vpop.f32.mrf.mxu0
    %246 = vdwg.mxu0
    %v247 = vmax.f32 %v244, 0.0
    %v248 = vpack.c.bf16 %v247, %v247
    %v249 = vld [vmem:[#allocation6] sm:$0xf]
    %v250 = vld [vmem:[#allocation6 + $0x4] sm:$0xf]
    %v251 = vld [vmem:[#allocation6 + $0x8] sm:$0xf]
    %v252 = vld [vmem:[#allocation6 + $0xc] sm:$0xf]
    %v253 = vld [vmem:[#allocation6 + $0x10] sm:$0xf]
    %v254 = vld [vmem:[#allocation6 + $0x14] sm:$0xf]
    %v255 = vld [vmem:[#allocation6 + $0x18] sm:$0xf]
    %v256 = vld [vmem:[#allocation6 + $0x1c] sm:$0xf]
    %v257 = vld [vmem:[#allocation6 + $0x20] sm:$0xf]
    %v258 = vld [vmem:[#allocation6 + $0x24] sm:$0xf]
    %v259 = vld [vmem:[#allocation6 + $0x28] sm:$0xf]
    %v260 = vld [vmem:[#allocation6 + $0x2c] sm:$0xf]
    %v261 = vld [vmem:[#allocation6 + $0x30] sm:$0xf]
    %v262 = vld [vmem:[#allocation6 + $0x34] sm:$0xf]
    %v263 = vld [vmem:[#allocation6 + $0x38] sm:$0xf]
    %v264 = vld [vmem:[#allocation6 + $0x3c] sm:$0xf]
    %v265 = vld [vmem:[%s5 + $0x2] sm:$0x1]
    %v266 = vperm.slane %v265, 0
    %v283 = vunpack.c.l.b16 %v249
    %v284 = vunpack.c.l.b16 %v250
    %v285 = vunpack.c.l.b16 %v251
    %v286 = vunpack.c.l.b16 %v252
    %v287 = vunpack.c.l.b16 %v253
    %v288 = vunpack.c.l.b16 %v254
    %v289 = vunpack.c.l.b16 %v255
    %v290 = vunpack.c.l.b16 %v256
    %v291 = vunpack.c.l.b16 %v257
    %v292 = vunpack.c.l.b16 %v258
    %v293 = vunpack.c.l.b16 %v259
    %v294 = vunpack.c.l.b16 %v260
    %v295 = vunpack.c.l.b16 %v261
    %v296 = vunpack.c.l.b16 %v262
    %v297 = vunpack.c.l.b16 %v263
    %v298 = vunpack.c.l.b16 %v264
    %v299 = vpack.c.b16 %v284, %v283
    %v300 = vpack.c.b16 %v286, %v285
    %v301 = vpack.c.b16 %v288, %v287
    %v302 = vpack.c.b16 %v290, %v289
    %v303 = vpack.c.b16 %v292, %v291
    %v304 = vpack.c.b16 %v294, %v293
    %v305 = vpack.c.b16 %v296, %v295
    %v306 = vpack.c.b16 %v298, %v297
    %315 = vmatpush.bf16.msra.mxu0 %v306
    %316 = vmatpush.bf16.msra.mxu0 %v305
    %317 = vmatpush.bf16.msra.mxu0 %v304
    %318 = vmatpush.bf16.msra.mxu0 %v303
    %319 = vmatpush.bf16.msra.mxu0 %v302
    %320 = vmatpush.bf16.msra.mxu0 %v301
    %321 = vmatpush.bf16.msra.mxu0 %v300
    %322 = vmatpush.bf16.msra.mxu0 %v299
    %323 = vmatmul.bf16.gmra.mxu0 %v248
    %v324 = vpop.f32.mrf.mxu0
    %v325 = vadd.f32 %v266, %v324
    %v326 = vpop.f32.mrf.mxu0
    %327 = vdwg.mxu0
    %v328 = vmax.f32 %v325, 0.0
    %v329 = vpack.c.bf16 %v328, %v328
    %v330 = vld [vmem:[#allocation7] sm:$0xf]
    %v331 = vld [vmem:[#allocation7 + $0x4] sm:$0xf]
    %v332 = vld [vmem:[#allocation7 + $0x8] sm:$0xf]
    %v333 = vld [vmem:[#allocation7 + $0xc] sm:$0xf]
    %v334 = vld [vmem:[#allocation7 + $0x10] sm:$0xf]
    %v335 = vld [vmem:[#allocation7 + $0x14] sm:$0xf]
    %v336 = vld [vmem:[#allocation7 + $0x18] sm:$0xf]
    %v337 = vld [vmem:[#allocation7 + $0x1c] sm:$0xf]
    %v338 = vld [vmem:[#allocation7 + $0x20] sm:$0xf]
    %v339 = vld [vmem:[#allocation7 + $0x24] sm:$0xf]
    %v340 = vld [vmem:[#allocation7 + $0x28] sm:$0xf]
    %v341 = vld [vmem:[#allocation7 + $0x2c] sm:$0xf]
    %v342 = vld [vmem:[#allocation7 + $0x30] sm:$0xf]
    %v343 = vld [vmem:[#allocation7 + $0x34] sm:$0xf]
    %v344 = vld [vmem:[#allocation7 + $0x38] sm:$0xf]
    %v345 = vld [vmem:[#allocation7 + $0x3c] sm:$0xf]
    %v346 = vld [vmem:[%s5 + $0x3] sm:$0x1]
    %v347 = vperm.slane %v346, 0
    %v364 = vunpack.c.l.b16 %v330
    %v365 = vunpack.c.l.b16 %v331
    %v366 = vunpack.c.l.b16 %v332
    %v367 = vunpack.c.l.b16 %v333
    %v368 = vunpack.c.l.b16 %v334
    %v369 = vunpack.c.l.b16 %v335
    %v370 = vunpack.c.l.b16 %v336
    %v371 = vunpack.c.l.b16 %v337
    %v372 = vunpack.c.l.b16 %v338
    %v373 = vunpack.c.l.b16 %v339
    %v374 = vunpack.c.l.b16 %v340
    %v375 = vunpack.c.l.b16 %v341
    %v376 = vunpack.c.l.b16 %v342
    %v377 = vunpack.c.l.b16 %v343
    %v378 = vunpack.c.l.b16 %v344
    %v379 = vunpack.c.l.b16 %v345
    %v380 = vpack.c.b16 %v365, %v364
    %v381 = vpack.c.b16 %v367, %v366
    %v382 = vpack.c.b16 %v369, %v368
    %v383 = vpack.c.b16 %v371, %v370
    %v384 = vpack.c.b16 %v373, %v372
    %v385 = vpack.c.b16 %v375, %v374
    %v386 = vpack.c.b16 %v377, %v376
    %v387 = vpack.c.b16 %v379, %v378
    %396 = vmatpush.bf16.msra.mxu0 %v387
    %397 = vmatpush.bf16.msra.mxu0 %v386
    %398 = vmatpush.bf16.msra.mxu0 %v385
    %399 = vmatpush.bf16.msra.mxu0 %v384
    %400 = vmatpush.bf16.msra.mxu0 %v383
    %401 = vmatpush.bf16.msra.mxu0 %v382
    %402 = vmatpush.bf16.msra.mxu0 %v381
    %403 = vmatpush.bf16.msra.mxu0 %v380
    %404 = vmatmul.bf16.gmra.mxu0 %v329
    %v405 = vpop.f32.mrf.mxu0
    %v406 = vadd.f32 %v347, %v405
    %v407 = vpop.f32.mrf.mxu0
    %408 = vdwg.mxu0
    %409 = vst [vmem:[%s6] sm:$0xff] %v406
    // Predicated region
    $region42: #{mlp_forward.1} parent=1 // pred_check
      _
    $region43: #{mlp_forward.1} parent=1 // pred_check_branch
      %411 = sbr.rel (0) target = $region45
    $region44: #{mlp_forward.1} parent=1 // pred_region
      _
    $region45: #{mlp_forward.1} parent=1 // pred_fallthru
      _
    // Predicated region
    $region46: #{mlp_forward.1} parent=1 // pred_check
      _
    $region47: #{mlp_forward.1} parent=1 // pred_check_branch
      %413 = sbr.rel (0) target = $region49
    $region48: #{mlp_forward.1} parent=1 // pred_region
      _
    $region49: #{mlp_forward.1} parent=1 // pred_fallthru
      _
    %414 = vsyncpa [#allocation3], 1
    %415 = vsyncpa [#allocation5], 1
    %416 = vsyncpa [#allocation8], 1

</llo_original>
